<compile_context>
chip_gen: v6e
topology: v6e:2x2x1
jax: 0.10.0
libtpu: 0.0.40
codegen_flags: <defaults>
</compile_context>

<pallas_src>
import jax
import jax.numpy as jnp
from jax.experimental import pallas as pl
from jax.experimental.pallas import tpu as pltpu


_LANE = 128
# Candidate lane-dense widths for the 2-D view (largest first).
_C_CANDIDATES = (4096, 2048, 1024, 512, 256, 128)
# Default per-tile byte budget (see _tile_bytes_for_device for the gen-aware
# clamp).  4 MiB * (2 input bufs + 2 output bufs) = 16 MiB footprint.
_DEFAULT_TILE_BYTES = 4 * 1024 * 1024
_VMEM_HEADROOM_BYTES = 4 * 1024 * 1024


def _copy_kernel(x_ref, o_ref):
    # Straight lane-dense tile copy: no [..., 0] cross-lane relayout — the
    # squeeze itself is a metadata reshape done in the wrapper.
    o_ref[...] = x_ref[...]


def _tile_bytes_for_device() -> int:
    """Per-generation tile budget, queried at trace time (never forks code)."""
    tile = _DEFAULT_TILE_BYTES
    try:
        vmem = int(pltpu.get_tpu_info().vmem_capacity_bytes)
        # Keep the 4x double-buffered footprint <= ~1/4 of physical VMEM.
        tile = min(tile, max(512 * 1024, vmem // 16))
    except Exception:
        # Unknown backend (e.g. interpret mode): keep the conservative default.
        pass
    return tile


def _native_sublane(dtype) -> int:
    """Dtype-native sublane multiple: 8 (4B), 16 (2B), 32 (1B)."""
    itemsize = jnp.dtype(dtype).itemsize
    return max(8, 32 // max(1, itemsize))


def _round_tile_rows(tr: int, rows: int, sub: int) -> int:
    tr = min(max(1, tr), rows)
    if tr == rows:
        return tr                      # full-extent block is always legal
    tr = (tr // sub) * sub             # round down to native sublane multiple
    if tr < sub:
        tr = sub
    if tr > rows:
        tr = rows
    return tr


def _tiled_copy_2d(x2d: jax.Array, tile_rows: int) -> jax.Array:
    rows, cols = x2d.shape
    itemsize = jnp.dtype(x2d.dtype).itemsize
    # 2 input buffers + 2 output buffers (auto double-buffering) + headroom.
    vmem_limit = 4 * tile_rows * cols * itemsize + _VMEM_HEADROOM_BYTES
    grid = (pl.cdiv(rows, tile_rows),)
    return pl.pallas_call(
        _copy_kernel,
        out_shape=jax.ShapeDtypeStruct((rows, cols), x2d.dtype),
        grid=grid,
        in_specs=[pl.BlockSpec((tile_rows, cols), lambda i: (i, 0))],
        out_specs=pl.BlockSpec((tile_rows, cols), lambda i: (i, 0)),
        compiler_params=pltpu.CompilerParams(
            # Independent row axis.  On v7x one could switch this axis to
            # pltpu.CORE_PARALLEL (or a core_map) to split DMAs across both
            # TensorCores; kept as "parallel" here for portability.
            # TODO(synk): enable CORE_PARALLEL on v7x once verified in trace.
            dimension_semantics=("parallel",),
            vmem_limit_bytes=int(vmem_limit),
        ),
        # NOTE: if the caller can donate the input, input_output_aliases={0: 0}
        # makes this materialization effectively free (same shape/dtype).
    )(x2d)


def squeeze_last(x: jax.Array, *, force_kernel: bool = False,
                 tile_rows: int | None = None) -> jax.Array:
    """Pallas implementation of torch.Tensor.squeeze(-1).

    Default path is a free metadata reshape (jnp.squeeze).  The Pallas copy
    kernel runs only with force_kernel=True; even then, shapes that cannot be
    viewed as a lane-dense (rows, k*128) slab (n % 128 != 0, empty, 0-d
    output) silently fall back to jnp.squeeze.
    """
    if x.ndim == 0 or x.shape[-1] != 1:
        # torch's squeeze(-1) is a no-op when the trailing dim != 1.
        return x

    out_shape = x.shape[:-1]
    n = x.size

    # Fast path: pure metadata reshape — zero HBM traffic, no kernel launch.
    if (not force_kernel) or len(out_shape) == 0 or n == 0 or n % _LANE != 0:
        return jnp.squeeze(x, axis=-1)

    # Lane-dense 2-D view: last dim is a large multiple of 128.
    cols = next(c for c in _C_CANDIDATES if n % c == 0)
    rows = n // cols

    itemsize = jnp.dtype(x.dtype).itemsize
    sub = _native_sublane(x.dtype)
    if tile_rows is None:
        target = _tile_bytes_for_device()
        tr = max(sub, (target // (cols * itemsize)) // sub * sub)
    else:
        tr = int(tile_rows)
    tr = _round_tile_rows(tr, rows, sub)

    x2d = x.reshape(rows, cols)
    y2d = _tiled_copy_2d(x2d, tr)
    return y2d.reshape(out_shape)


if __name__ == "__main__":
    key = jax.random.PRNGKey(0)
    k1, k2, k3, k4 = jax.random.split(key, 4)

    # 1) Explicit kernel path (f32): lane-dense tiled copy
    #    (rows=16, cols=4096, tile_rows=8 -> 2 grid steps).
    x1 = jax.random.normal(k1, (4, 16, 1024, 1), dtype=jnp.float32)
    y1 = squeeze_last(x1, force_kernel=True, tile_rows=8)
    jax.block_until_ready(y1)
    ref1 = jnp.squeeze(x1, axis=-1)
    assert y1.shape == (4, 16, 1024), y1.shape
    assert y1.dtype == x1.dtype
    assert jnp.array_equal(y1, ref1)

    # 2) Explicit kernel path (bf16): exercises dtype-native sublane rounding
    #    (requested tile_rows=8 is rounded up to the bf16-native 16).
    x2 = jax.random.normal(k2, (4, 16, 1024, 1), dtype=jnp.float32).astype(jnp.bfloat16)
    y2 = squeeze_last(x2, force_kernel=True, tile_rows=8)
    jax.block_until_ready(y2)
    assert y2.shape == (4, 16, 1024), y2.shape
    assert y2.dtype == jnp.bfloat16
    assert jnp.array_equal(y2, jnp.squeeze(x2, axis=-1))

    # 3) Default path: free metadata reshape, no kernel launch (even largish).
    x3 = jax.random.normal(k3, (2, 8, 512, 1), dtype=jnp.float32)
    y3 = squeeze_last(x3)
    jax.block_until_ready(y3)
    assert y3.shape == (2, 8, 512), y3.shape
    assert jnp.array_equal(y3, jnp.squeeze(x3, axis=-1))

    # 4) Trailing dim != 1: torch's squeeze(-1) is a no-op.
    x4 = jax.random.normal(k4, (2, 8, 32), dtype=jnp.float32)
    y4 = squeeze_last(x4)
    assert y4.shape == x4.shape
    assert jnp.array_equal(y4, x4)

    # 5) Tiny input under force_kernel with n % 128 == 0 (rows=1 full-extent
    #    block) and a non-alignable one (falls back to jnp.squeeze).
    x5 = jnp.arange(2 * 8 * 32, dtype=jnp.float32).reshape(2, 8, 32, 1)
    y5 = squeeze_last(x5, force_kernel=True)
    jax.block_until_ready(y5)
    assert jnp.array_equal(y5, jnp.squeeze(x5, axis=-1))
    x6 = jnp.arange(2 * 3 * 5, dtype=jnp.float32).reshape(2, 3, 5, 1)
    y6 = squeeze_last(x6, force_kernel=True)   # documented fallback
    assert jnp.array_equal(y6, jnp.squeeze(x6, axis=-1))

    print("KERNEL_OK")
</pallas_src>

<mosaic_0001>
module attributes {stable_mosaic.version = 11 : i64} {
  func.func @_copy_kernel(%arg0: i32, %arg1: memref<8x4096xf32, #tpu.memory_space<vmem>>, %arg2: memref<8x4096xf32, #tpu.memory_space<vmem>>) attributes {dimension_semantics = [#tpu.dimension_semantics<parallel>], iteration_bounds = array<i64: 2>, scalar_prefetch = 0 : i64, scratch_operands = 0 : i64, tpu.core_type = #tpu.core_type<tc>, window_params = [{transform_indices = @transform_0, window_bounds = array<i64: 8, 4096>}, {transform_indices = @transform_1, window_bounds = array<i64: 8, 4096>}]} {
    %c0 = arith.constant 0 : index
    %c0_0 = arith.constant 0 : index
    %0 = vector.load %arg1[%c0, %c0_0] : memref<8x4096xf32, #tpu.memory_space<vmem>>, vector<8x4096xf32>
    %c0_1 = arith.constant 0 : index
    %c0_2 = arith.constant 0 : index
    %1 = vector.load %arg2[%c0_1, %c0_2] : memref<8x4096xf32, #tpu.memory_space<vmem>>, vector<8x4096xf32>
    tpu.vector_store %arg2[%c0_1, %c0_2], %0 {strides = array<i32>} : memref<8x4096xf32, #tpu.memory_space<vmem>>, vector<8x4096xf32>,
    return
  }
  func.func @transform_0(%arg0: i32) -> (i32, i32) {
    %c0_i32 = arith.constant 0 : i32
    %c0_i32_0 = arith.constant 0 : i32
    return %arg0, %c0_i32 : i32, i32
  }
  func.func @transform_1(%arg0: i32) -> (i32, i32) {
    %c0_i32 = arith.constant 0 : i32
    %c0_i32_0 = arith.constant 0 : i32
    return %arg0, %c0_i32 : i32, i32
  }
}

</mosaic_0001>

<llo_original>
// kernel: tpu_custom_call.1
$region0: #{tpu_custom_call.1}
  #allocation0 [shape = 'u32[]', space=smem, size = 0x4, offset = 0x4, fixed_abs, tag = 'smem constant byte address 0x4 - core index']
  #allocation1 [shape = 'u32[144,128]{1,0:T(1,128)}', space=vmem, size = 0x12000, scoped, tag = 'internal scratch']
  %s0 = inlined_call_operand.hbm [shape: f32[16,4096], index: 0, kind: input, shape index: {}]
  %s1 = inlined_call_operand.hbm [shape: f32[16,4096], index: 1, kind: output, shape index: {}]
  %s2 = sld [smem:[#allocation0]]
  $region41: #{tpu_custom_call.1} parent=0
    _
  %s4 = ssub.s32 1, %s2
  %s5 = scalar_select 0, %s4, %s2
  $region1: #{tpu_custom_call.1} parent=0
    #allocation2 [shape = 'u8[262144]{0}', space=vmem, size = 0x40000, scoped, tag = 'input window, operand 0']
    #allocation3 [shape = 's32[2]{0}', space=sflag, size = 0x8, scoped, tag = 'scoped memory for tpu_custom_call.1']
    #allocation4 [shape = 's32[2]{0}', space=sflag, size = 0x8, scoped, tag = 'scoped memory for tpu_custom_call.1']
    #allocation5 [shape = 'u8[262144]{0}', space=vmem, size = 0x40000, scoped, tag = 'output window, operand 0']
    %6 = vsyncpa [#allocation3], 0
    %s7 = scalar_lea.sflag [#allocation3], 1
    %8 = vsyncpa %s7, 0
    %9 = vsyncpa [#allocation4], 0
    %s10 = scalar_lea.sflag [#allocation4], 1
    %11 = vsyncpa %s10, 0
    loop: start=0, step=1, limit=4
    $region2: #{tpu_custom_call.1} parent=1 // loop_pre_header
      _
    $region3: #{tpu_custom_call.1} parent=1 // loop_header
      %s13 = sphi 0, %s17
      %p14 = scmp.ge.s32.totalorder %s13, 4
      %s23 = sphi 0, %s25
      %s26 = sphi 0, %s23
      %s27 = sphi 0, %s26
      %s43 = sphi 0, %s27
      %s49 = sphi 0, %s51
      %s52 = sphi 0, %s49
      %s53 = sphi 0, %s52
      %s69 = sphi 0, %s53
    $region4: #{tpu_custom_call.1} parent=1 // loop_header_branch
      %16 = sbr.rel (%p14) target = $region8
    $region5: #{tpu_custom_call.1} parent=1 // loop_body
      %s18 = ssub.s32 %s13, 1
      %s19 = ssub.s32 %s13, 2
      %s20 = sadd.s32 %s13, 1
      %s21 = ssub.s32 %s13, %s20
      %p22 = scmp.eq.s32.totalorder %s21, 0
      %s24 = sadd.s32 %s23, 1
      %s25 = scalar_select %p22, %s23, %s24
      %p28 = pneg %p22
      %p29 = scmp.eq.s32.totalorder %s13, 1
      %p30 = por %p28, %p29
      %p31 = scmp.ne.s32.totalorder %s23, %s26
      %p32 = scmp.eq.s32.totalorder %s13, 0
      %p33 = por %p31, %p32
      %p34 = scmp.ne.s32.totalorder %s23, %s26
      %p35 = scmp.eq.s32.totalorder %s18, 1
      %p36 = por %p34, %p35
      %p37 = scmp.ne.s32.totalorder %s26, %s27
      %p38 = scmp.eq.s32.totalorder %s18, 0
      %p39 = por %p37, %p38
      %p40 = scmp.ne.s32.totalorder %s26, %s27
      %p41 = scmp.eq.s32.totalorder %s19, 1
      %p42 = por %p40, %p41
      %p44 = scmp.ne.s32.totalorder %s27, %s43
      %p45 = scmp.eq.s32.totalorder %s19, 0
      %p46 = por %p44, %p45
      %s47 = ssub.s32 %s13, %s20
      %p48 = scmp.eq.s32.totalorder %s47, 0
      %s50 = sadd.s32 %s49, 1
      %s51 = scalar_select %p48, %s49, %s50
      %p54 = pneg %p48
      %p55 = scmp.eq.s32.totalorder %s13, 1
      %p56 = por %p54, %p55
      %p57 = scmp.ne.s32.totalorder %s49, %s52
      %p58 = scmp.eq.s32.totalorder %s13, 0
      %p59 = por %p57, %p58
      %p60 = scmp.ne.s32.totalorder %s49, %s52
      %p61 = scmp.eq.s32.totalorder %s18, 1
      %p62 = por %p60, %p61
      %p63 = scmp.ne.s32.totalorder %s52, %s53
      %p64 = scmp.eq.s32.totalorder %s18, 0
      %p65 = por %p63, %p64
      %p66 = scmp.ne.s32.totalorder %s52, %s53
      %p67 = scmp.eq.s32.totalorder %s19, 1
      %p68 = por %p66, %p67
      %p70 = scmp.ne.s32.totalorder %s53, %s69
      %p71 = scmp.eq.s32.totalorder %s19, 0
      %p72 = por %p70, %p71
      %p73 = scmp.le.s32.totalorder 1, %s13
      %p74 = scmp.lt.s32.totalorder %s13, 3
      %p75 = pnand %p73, %p74
      %p76 = pneg %p75
      // Predicated region
      $region9: #{tpu_custom_call.1} parent=5 // pred_check
        _
      $region10: #{tpu_custom_call.1} parent=5 // pred_check_branch
        %78 = sbr.rel (%p75) target = $region12
      $region11: #{tpu_custom_call.1} parent=5 // pred_region
        %s79 = ssub.s32 %s13, 1
      $region12: #{tpu_custom_call.1} parent=5 // pred_fallthru
        _
      %p80 = scmp.lt.s32.totalorder %s13, 2
      // Predicated region
      $region13: #{tpu_custom_call.1} parent=5 // pred_check
        %p81 = pneg %p80
      $region14: #{tpu_custom_call.1} parent=5 // pred_check_branch
        %83 = sbr.rel (%p81) target = $region16
      $region15: #{tpu_custom_call.1} parent=5 // pred_region
        // Predicated region
        $region17: #{tpu_custom_call.1} parent=15 // pred_check
          %p84 = pneg %p33
        $region18: #{tpu_custom_call.1} parent=15 // pred_check_branch
          %86 = sbr.rel (%p84) target = $region20
        $region19: #{tpu_custom_call.1} parent=15 // pred_region
          %s87 = sand.u32 %s23, 1
          %s88 = scalar_lea.sflag [#allocation3], %s87
          %s89 = sand.u32 %s23, 1
          %s90 = smul.addr %s89, 256
          %s91 = scalar_lea.vmem [#allocation2], %s90
          %s93 = ssub.s32 4096, 4096
          %94 = vsyncadd %s88, %s93
          %s95 = smul.addr %s13, 32
          %s96 = smul.addr %s95, 128
          %s97 = scalar_lea.hbm %s0, %s96
          %s99 = sshll.u32 %s91, 4
          %s100 = int_to_ptr.vmem [resolvable:$true] %s99
          %102 = dma.hbm_to_vmem [thread:$0]  %s97, 4096, %s100, %s88
        $region20: #{tpu_custom_call.1} parent=15 // pred_fallthru
          _
      $region16: #{tpu_custom_call.1} parent=5 // pred_fallthru
        _
      %p103 = scmp.le.s32.totalorder 1, %s13
      %p104 = scmp.lt.s32.totalorder %s13, 3
      %p105 = pnand %p103, %p104
      %p106 = pneg %p105
      // Predicated region
      $region21: #{tpu_custom_call.1} parent=5 // pred_check
        _
      $region22: #{tpu_custom_call.1} parent=5 // pred_check_branch
        %108 = sbr.rel (%p105) target = $region24
      $region23: #{tpu_custom_call.1} parent=5 // pred_region
        %s109 = ssub.s32 %s13, 1
        %s110 = sand.u32 %s26, 1
        %s111 = scalar_lea.sflag [#allocation3], %s110
        %s112 = sand.u32 %s26, 1
        %s113 = smul.addr %s112, 256
        %s114 = scalar_lea.vmem [#allocation2], %s113
        // Predicated region
        $region25: #{tpu_custom_call.1} parent=23 // pred_check
          %p115 = pneg %p39
        $region26: #{tpu_custom_call.1} parent=23 // pred_check_branch
          %117 = sbr.rel (%p115) target = $region28
        $region27: #{tpu_custom_call.1} parent=23 // pred_region
          %118 = dma.done %s111, 4096
        $region28: #{tpu_custom_call.1} parent=23 // pred_fallthru
          _
        %s119 = sand.u32 %s26, 1
        %s120 = scalar_lea.sflag [#allocation3], %s119
        %s121 = sand.u32 %s26, 1
        %s122 = smul.addr %s121, 256
        %s123 = scalar_lea.vmem [#allocation2], %s122
        %p124 = pneg %p39
        %p125 = pneg %p36
        %p126 = pneg %p65
        %p127 = pneg %p62
        %s128 = sand.u32 %s52, 1
        %s129 = scalar_lea.sflag [#allocation4], %s128
        %s130 = sand.u32 %s52, 1
        %s131 = smul.addr %s130, 256
        %s132 = scalar_lea.vmem [#allocation5], %s131
        %v133 = vld [vmem:[%s114] sm:$0xff]
        %v134 = vld [vmem:[%s114 + $0x8] sm:$0xff]
        %v135 = vld [vmem:[%s114 + $0x10] sm:$0xff]
        %v136 = vld [vmem:[%s114 + $0x18] sm:$0xff]
        %v137 = vld [vmem:[%s114 + $0x20] sm:$0xff]
        %v138 = vld [vmem:[%s114 + $0x28] sm:$0xff]
        %v139 = vld [vmem:[%s114 + $0x30] sm:$0xff]
        %v140 = vld [vmem:[%s114 + $0x38] sm:$0xff]
        %v141 = vld [vmem:[%s114 + $0x40] sm:$0xff]
        %v142 = vld [vmem:[%s114 + $0x48] sm:$0xff]
        %v143 = vld [vmem:[%s114 + $0x50] sm:$0xff]
        %v144 = vld [vmem:[%s114 + $0x58] sm:$0xff]
        %v145 = vld [vmem:[%s114 + $0x60] sm:$0xff]
        %v146 = vld [vmem:[%s114 + $0x68] sm:$0xff]
        %v147 = vld [vmem:[%s114 + $0x70] sm:$0xff]
        %v148 = vld [vmem:[%s114 + $0x78] sm:$0xff]
        %v149 = vld [vmem:[%s114 + $0x80] sm:$0xff]
        %v150 = vld [vmem:[%s114 + $0x88] sm:$0xff]
        %v151 = vld [vmem:[%s114 + $0x90] sm:$0xff]
        %v152 = vld [vmem:[%s114 + $0x98] sm:$0xff]
        %v153 = vld [vmem:[%s114 + $0xa0] sm:$0xff]
        %v154 = vld [vmem:[%s114 + $0xa8] sm:$0xff]
        %v155 = vld [vmem:[%s114 + $0xb0] sm:$0xff]
        %v156 = vld [vmem:[%s114 + $0xb8] sm:$0xff]
        %v157 = vld [vmem:[%s114 + $0xc0] sm:$0xff]
        %v158 = vld [vmem:[%s114 + $0xc8] sm:$0xff]
        %v159 = vld [vmem:[%s114 + $0xd0] sm:$0xff]
        %v160 = vld [vmem:[%s114 + $0xd8] sm:$0xff]
        %v161 = vld [vmem:[%s114 + $0xe0] sm:$0xff]
        %v162 = vld [vmem:[%s114 + $0xe8] sm:$0xff]
        %v163 = vld [vmem:[%s114 + $0xf0] sm:$0xff]
        %v164 = vld [vmem:[%s114 + $0xf8] sm:$0xff]
        %165 = vst [vmem:[%s132] sm:$0xff] %v133
        %166 = vst [vmem:[%s132 + $0x8] sm:$0xff] %v134
        %167 = vst [vmem:[%s132 + $0x10] sm:$0xff] %v135
        %168 = vst [vmem:[%s132 + $0x18] sm:$0xff] %v136
        %169 = vst [vmem:[%s132 + $0x20] sm:$0xff] %v137
        %170 = vst [vmem:[%s132 + $0x28] sm:$0xff] %v138
        %171 = vst [vmem:[%s132 + $0x30] sm:$0xff] %v139
        %172 = vst [vmem:[%s132 + $0x38] sm:$0xff] %v140
        %173 = vst [vmem:[%s132 + $0x40] sm:$0xff] %v141
        %174 = vst [vmem:[%s132 + $0x48] sm:$0xff] %v142
        %175 = vst [vmem:[%s132 + $0x50] sm:$0xff] %v143
        %176 = vst [vmem:[%s132 + $0x58] sm:$0xff] %v144
        %177 = vst [vmem:[%s132 + $0x60] sm:$0xff] %v145
        %178 = vst [vmem:[%s132 + $0x68] sm:$0xff] %v146
        %179 = vst [vmem:[%s132 + $0x70] sm:$0xff] %v147
        %180 = vst [vmem:[%s132 + $0x78] sm:$0xff] %v148
        %181 = vst [vmem:[%s132 + $0x80] sm:$0xff] %v149
        %182 = vst [vmem:[%s132 + $0x88] sm:$0xff] %v150
        %183 = vst [vmem:[%s132 + $0x90] sm:$0xff] %v151
        %184 = vst [vmem:[%s132 + $0x98] sm:$0xff] %v152
        %185 = vst [vmem:[%s132 + $0xa0] sm:$0xff] %v153
        %186 = vst [vmem:[%s132 + $0xa8] sm:$0xff] %v154
        %187 = vst [vmem:[%s132 + $0xb0] sm:$0xff] %v155
        %188 = vst [vmem:[%s132 + $0xb8] sm:$0xff] %v156
        %189 = vst [vmem:[%s132 + $0xc0] sm:$0xff] %v157
        %190 = vst [vmem:[%s132 + $0xc8] sm:$0xff] %v158
        %191 = vst [vmem:[%s132 + $0xd0] sm:$0xff] %v159
        %192 = vst [vmem:[%s132 + $0xd8] sm:$0xff] %v160
        %193 = vst [vmem:[%s132 + $0xe0] sm:$0xff] %v161
        %194 = vst [vmem:[%s132 + $0xe8] sm:$0xff] %v162
        %195 = vst [vmem:[%s132 + $0xf0] sm:$0xff] %v163
        %196 = vst [vmem:[%s132 + $0xf8] sm:$0xff] %v164
        %s197 = sand.u32 %s52, 1
        %s198 = scalar_lea.sflag [#allocation4], %s197
        %s199 = sand.u32 %s52, 1
        %s200 = smul.addr %s199, 256
        %s201 = scalar_lea.vmem [#allocation5], %s200
        // Predicated region
        $region29: #{tpu_custom_call.1} parent=23 // pred_check
          %p202 = pneg %p62
        $region30: #{tpu_custom_call.1} parent=23 // pred_check_branch
          %204 = sbr.rel (%p202) target = $region32
        $region31: #{tpu_custom_call.1} parent=23 // pred_region
          %s206 = ssub.s32 4096, 4096
          %207 = vsyncadd %s198, %s206
          %s208 = smul.addr %s18, 32
          %s209 = smul.addr %s208, 128
          %s210 = scalar_lea.hbm %s1, %s209
          %s212 = sshll.u32 %s201, 4
          %s213 = int_to_ptr.vmem [resolvable:$true] %s212
          %215 = dma.vmem_to_hbm [thread:$0]  %s213, 4096, %s210, %s198
        $region32: #{tpu_custom_call.1} parent=23 // pred_fallthru
          _
      $region24: #{tpu_custom_call.1} parent=5 // pred_fallthru
        _
      %p216 = scmp.le.s32.totalorder 2, %s13
      // Predicated region
      $region33: #{tpu_custom_call.1} parent=5 // pred_check
        %p217 = pneg %p216
      $region34: #{tpu_custom_call.1} parent=5 // pred_check_branch
        %219 = sbr.rel (%p217) target = $region36
      $region35: #{tpu_custom_call.1} parent=5 // pred_region
        %s220 = ssub.s32 %s13, 2
        // Predicated region
        $region37: #{tpu_custom_call.1} parent=35 // pred_check
          %p221 = pneg %p68
        $region38: #{tpu_custom_call.1} parent=35 // pred_check_branch
          %223 = sbr.rel (%p221) target = $region40
        $region39: #{tpu_custom_call.1} parent=35 // pred_region
          %s224 = sand.u32 %s53, 1
          %s225 = scalar_lea.sflag [#allocation4], %s224
          %s226 = sand.u32 %s53, 1
          %s227 = smul.addr %s226, 256
          %s228 = scalar_lea.vmem [#allocation5], %s227
          %229 = dma.done %s225, 4096
        $region40: #{tpu_custom_call.1} parent=35 // pred_fallthru
          _
      $region36: #{tpu_custom_call.1} parent=5 // pred_fallthru
        _
    $region6: #{tpu_custom_call.1} parent=1 // loop_footer
      %s17 = sadd.s32 1, %s13
    $region7: #{tpu_custom_call.1} parent=1 // loop_footer_branch
      %12 = sbr.rel target = $region3
    $region8: #{tpu_custom_call.1} parent=1 // loop_exit
      _
    %230 = vsyncpa [#allocation3], 1
    %s231 = scalar_lea.sflag [#allocation3], 1
    %232 = vsyncpa %s231, 1
    %233 = vsyncpa [#allocation4], 1
    %s234 = scalar_lea.sflag [#allocation4], 1
    %235 = vsyncpa %s234, 1

</llo_original>
